<compile_context>
chip_gen: v7x
topology: tpu7x:2x2x1
jax: 0.10.0
libtpu: 0.0.40
codegen_flags: <defaults>
</compile_context>

<pallas_src>
import jax
import jax.numpy as jnp
from jax.experimental import pallas as pl
from jax.experimental.pallas import tpu as pltpu

_LANES = 128
_SUBLANES = 8
_NEG_BIG = -1e30          # effective -inf that avoids (-inf) - (-inf) = NaN
_NUM_CORE_SPLITS = 2      # v7x has 2 TensorCores; harmless (serial) elsewhere
_SMALL_THRESHOLD = 1 << 18


def _pad_1d(arr: jax.Array, total: int, value: float) -> jax.Array:
    pad = total - arr.shape[0]
    if pad == 0:
        return arr
    return jnp.pad(arr, (0, pad), constant_values=value)


# ----------------------------------------------------------------------------
# Small / medium path: gridless, two full-array VMEM inputs, one (1,1) output.
# ----------------------------------------------------------------------------
def _lws_small_kernel(w_ref, x_ref, o_ref):
    w = w_ref[...].astype(jnp.float32)
    s = w + x_ref[...].astype(jnp.float32)      # weights + log_box_vols

    def lse(a):
        m = jnp.max(jnp.max(a, axis=1, keepdims=True), axis=0, keepdims=True)
        t = jnp.sum(jnp.sum(jnp.exp(a - m), axis=1, keepdims=True),
                    axis=0, keepdims=True)
        # NOTE: if every real weight were ~ -1e30, t could underflow to 0 and
        # log(t) would be -inf; not reachable for realistic parameters.
        return m + jnp.log(t)                   # (1, 1)

    o_ref[...] = (lse(s) - lse(w)).astype(o_ref.dtype)


def _log_weighted_sum_small(weights: jax.Array, log_box_vols: jax.Array) -> jax.Array:
    M = weights.shape[0]
    w = weights.astype(jnp.float32)
    x = log_box_vols.astype(jnp.float32)

    if M % _LANES == 0:                                   # free bitcast reshape
        rows = M // _LANES
        w2, x2 = w.reshape(rows, _LANES), x.reshape(rows, _LANES)
    elif M <= _SUBLANES * _LANES:                         # module-sized: no copy
        w2, x2 = w.reshape(1, M), x.reshape(1, M)
    else:                                                 # pad last partial row
        rows = pl.cdiv(M, _LANES)
        total = rows * _LANES
        w2 = _pad_1d(w, total, _NEG_BIG).reshape(rows, _LANES)
        x2 = _pad_1d(x, total, 0.0).reshape(rows, _LANES)

    out = pl.pallas_call(
        _lws_small_kernel,
        out_shape=jax.ShapeDtypeStruct((1, 1), jnp.float32),
        in_specs=[pl.BlockSpec(memory_space=pltpu.MemorySpace.VMEM),
                  pl.BlockSpec(memory_space=pltpu.MemorySpace.VMEM)],
        out_specs=pl.BlockSpec(memory_space=pltpu.MemorySpace.VMEM),
    )(w2, x2)
    return out[0, 0]


# ----------------------------------------------------------------------------
# Large-M path: streaming per-block partial logsumexp with (8,128) accumulators.
# ----------------------------------------------------------------------------
def _lws_tiled_kernel(w_ref, x_ref, mw_o, lw_o, ms_o, ls_o,
                      mw_acc, lw_acc, ms_acc, ls_acc):
    i = pl.program_id(1)

    @pl.when(i == 0)
    def _init():
        mw_acc[...] = jnp.full(mw_acc.shape, _NEG_BIG, jnp.float32)
        ms_acc[...] = jnp.full(ms_acc.shape, _NEG_BIG, jnp.float32)
        lw_acc[...] = jnp.zeros(lw_acc.shape, jnp.float32)
        ls_acc[...] = jnp.zeros(ls_acc.shape, jnp.float32)

    w = w_ref[...].astype(jnp.float32)            # (block_rows, 128)
    s = w + x_ref[...].astype(jnp.float32)        # weights + log_box_vols
    fold = w.shape[0] // _SUBLANES
    wr = w.reshape(fold, _SUBLANES, _LANES)       # sublane-tile preserving split
    sr = s.reshape(fold, _SUBLANES, _LANES)

    # Block-local partial logsumexp: one exp per element per stream.
    bm_w = jnp.max(wr, axis=0)                              # (8, 128)
    bl_w = jnp.sum(jnp.exp(wr - bm_w[None]), axis=0)        # (8, 128)
    bm_s = jnp.max(sr, axis=0)
    bl_s = jnp.sum(jnp.exp(sr - bm_s[None]), axis=0)

    # Online-combine only the tiny (8,128) summaries into the accumulators.
    nm_w = jnp.maximum(mw_acc[...], bm_w)
    lw_acc[...] = lw_acc[...] * jnp.exp(mw_acc[...] - nm_w) + bl_w * jnp.exp(bm_w - nm_w)
    mw_acc[...] = nm_w

    nm_s = jnp.maximum(ms_acc[...], bm_s)
    ls_acc[...] = ls_acc[...] * jnp.exp(ms_acc[...] - nm_s) + bl_s * jnp.exp(bm_s - nm_s)
    ms_acc[...] = nm_s

    @pl.when(i == pl.num_programs(1) - 1)
    def _finalize():
        mw_o[0] = mw_acc[...]
        lw_o[0] = lw_acc[...]
        ms_o[0] = ms_acc[...]
        ls_o[0] = ls_acc[...]


def _log_weighted_sum_tiled(
    weights: jax.Array,
    log_box_vols: jax.Array,
    *,
    max_block_rows: int = 1024,
    min_steps_per_core: int = 4,
) -> jax.Array:
    M = weights.shape[0]
    rows = pl.cdiv(M, _LANES)
    rows8 = pl.cdiv(rows, _SUBLANES) * _SUBLANES

    # Adaptive tiling: big lane-dense blocks, >= min_steps_per_core reduction
    # steps per core for DMA/compute overlap, and only ~1% row padding.
    nb_per_core = max(min_steps_per_core,
                      pl.cdiv(rows8, _NUM_CORE_SPLITS * max_block_rows))
    nb_total = _NUM_CORE_SPLITS * nb_per_core
    block_rows = pl.cdiv(pl.cdiv(rows8, nb_total), _SUBLANES) * _SUBLANES
    rows_p = nb_total * block_rows
    total = rows_p * _LANES

    # TODO(synk): when M is not already grid-aligned the jnp.pad below still
    # costs one extra HBM write+read per input; a manual-DMA ragged tail
    # (memory_space=pl.ANY + in-kernel row mask) would remove that copy.
    w2 = _pad_1d(weights.astype(jnp.float32), total, _NEG_BIG).reshape(rows_p, _LANES)
    x2 = _pad_1d(log_box_vols.astype(jnp.float32), total, 0.0).reshape(rows_p, _LANES)

    part = jax.ShapeDtypeStruct((_NUM_CORE_SPLITS, _SUBLANES, _LANES), jnp.float32)
    mw, lw, ms, ls = pl.pallas_call(
        _lws_tiled_kernel,
        out_shape=(part, part, part, part),
        grid_spec=pltpu.PrefetchScalarGridSpec(
            num_scalar_prefetch=0,
            grid=(_NUM_CORE_SPLITS, nb_per_core),
            in_specs=[
                pl.BlockSpec((block_rows, _LANES),
                             lambda c, i: (c * nb_per_core + i, 0)),
                pl.BlockSpec((block_rows, _LANES),
                             lambda c, i: (c * nb_per_core + i, 0)),
            ],
            out_specs=[
                pl.BlockSpec((1, _SUBLANES, _LANES), lambda c, i: (c, 0, 0))
            ] * 4,
            scratch_shapes=[pltpu.VMEM((_SUBLANES, _LANES), jnp.float32)] * 4,
        ),
        compiler_params=pltpu.CompilerParams(
            dimension_semantics=("parallel", "arbitrary")),
    )(w2, x2)

    # Tiny XLA epilogue combining the per-core (max, sum) partials.
    def combine(m, l):
        g = jnp.max(m)
        t = jnp.sum(l * jnp.exp(m - g))   # padded slots (m = -1e30) -> exactly 0
        return g + jnp.log(t)

    return combine(ms, ls) - combine(mw, lw)


# ----------------------------------------------------------------------------
# Public entry point.
# ----------------------------------------------------------------------------
def log_weighted_sum(
    weights: jax.Array,
    log_box_vols: jax.Array,
    *,
    small_threshold: int = _SMALL_THRESHOLD,
    max_block_rows: int = 1024,
) -> jax.Array:
    """weights: (M,), log_box_vols: (M,) -> scalar (float32)."""
    assert weights.ndim == 1 and log_box_vols.shape == weights.shape
    if weights.shape[0] <= small_threshold:
        return _log_weighted_sum_small(weights, log_box_vols)
    return _log_weighted_sum_tiled(weights, log_box_vols,
                                   max_block_rows=max_block_rows)


def _reference(weights, log_box_vols):
    return jax.nn.logsumexp(weights + log_box_vols, axis=0) - jax.nn.logsumexp(
        weights, axis=0
    )


if __name__ == "__main__":
    key = jax.random.PRNGKey(0)
    k_w, k_x, k_w2, k_x2, k_w3, k_x3 = jax.random.split(key, 6)

    # --- module-sized case (num_models ~ 8): gridless path, zero copies ------
    num_models = 8
    weights = jax.random.uniform(k_w, (num_models,), dtype=jnp.float32)  # ~torch.rand
    log_box_vols = jax.random.normal(k_x, (num_models,), dtype=jnp.float32) - 1.0
    out_small = jax.block_until_ready(log_weighted_sum(weights, log_box_vols))
    ref_small = _reference(weights, log_box_vols)
    assert jnp.allclose(out_small, ref_small, atol=1e-5, rtol=1e-5), (out_small, ref_small)

    # --- medium M (non-multiple of 128): still the gridless path -------------
    m_mid = 70_001
    w_mid = jax.random.uniform(k_w2, (m_mid,), dtype=jnp.float32)
    x_mid = jax.random.normal(k_x2, (m_mid,), dtype=jnp.float32) - 1.0
    out_mid = jax.block_until_ready(log_weighted_sum(w_mid, x_mid))
    ref_mid = _reference(w_mid, x_mid)
    assert jnp.allclose(out_mid, ref_mid, atol=2e-4, rtol=1e-4), (out_mid, ref_mid)

    # --- large M: streaming 2-way-split tiled path (exercises padding) -------
    m_big = 300_001
    w_big = jax.random.uniform(k_w3, (m_big,), dtype=jnp.float32)
    x_big = jax.random.normal(k_x3, (m_big,), dtype=jnp.float32) - 1.0
    out_big = jax.block_until_ready(log_weighted_sum(w_big, x_big))
    ref_big = _reference(w_big, x_big)
    assert jnp.allclose(out_big, ref_big, atol=5e-4, rtol=1e-4), (out_big, ref_big)

    print("KERNEL_OK")
</pallas_src>

<mosaic_0001>
module attributes {stable_mosaic.version = 11 : i64} {
  func.func @_lws_small_kernel(%arg0: memref<1x8xf32, #tpu.memory_space<vmem>>, %arg1: memref<1x8xf32, #tpu.memory_space<vmem>>, %arg2: memref<1x1xf32, #tpu.memory_space<vmem>>) attributes {dimension_semantics = [], scalar_prefetch = 0 : i64, scratch_operands = 0 : i64, tpu.core_type = #tpu.core_type<tc>} {
    %c0 = arith.constant 0 : index
    %c0_0 = arith.constant 0 : index
    %0 = vector.load %arg0[%c0, %c0_0] : memref<1x8xf32, #tpu.memory_space<vmem>>, vector<1x8xf32>
    %c0_1 = arith.constant 0 : index
    %c0_2 = arith.constant 0 : index
    %1 = vector.load %arg1[%c0_1, %c0_2] : memref<1x8xf32, #tpu.memory_space<vmem>>, vector<1x8xf32>
    %2 = arith.addf %0, %1 : vector<1x8xf32>
    %cst = arith.constant dense<0xFF800000> : vector<1xf32>
    %3 = vector.multi_reduction <maximumf>, %2, %cst [1] : vector<1x8xf32> to vector<1xf32>
    %4 = vector.shape_cast %3 : vector<1xf32> to vector<1x1xf32>
    %cst_3 = arith.constant dense<0xFF800000> : vector<1xf32>
    %5 = vector.multi_reduction <maximumf>, %4, %cst_3 [0] : vector<1x1xf32> to vector<1xf32>
    %6 = vector.shape_cast %5 : vector<1xf32> to vector<1x1xf32>
    %7 = vector.broadcast %6 : vector<1x1xf32> to vector<1x8xf32>
    %8 = arith.subf %2, %7 : vector<1x8xf32>
    %9 = math.exp %8 : vector<1x8xf32>
    %cst_4 = arith.constant dense<0.000000e+00> : vector<1xf32>
    %10 = vector.multi_reduction <add>, %9, %cst_4 [1] : vector<1x8xf32> to vector<1xf32>
    %11 = vector.shape_cast %10 : vector<1xf32> to vector<1x1xf32>
    %cst_5 = arith.constant dense<0.000000e+00> : vector<1xf32>
    %12 = vector.multi_reduction <add>, %11, %cst_5 [0] : vector<1x1xf32> to vector<1xf32>
    %13 = vector.shape_cast %12 : vector<1xf32> to vector<1x1xf32>
    %14 = math.log %13 : vector<1x1xf32>
    %15 = arith.addf %6, %14 : vector<1x1xf32>
    %cst_6 = arith.constant dense<0xFF800000> : vector<1xf32>
    %16 = vector.multi_reduction <maximumf>, %0, %cst_6 [1] : vector<1x8xf32> to vector<1xf32>
    %17 = vector.shape_cast %16 : vector<1xf32> to vector<1x1xf32>
    %cst_7 = arith.constant dense<0xFF800000> : vector<1xf32>
    %18 = vector.multi_reduction <maximumf>, %17, %cst_7 [0] : vector<1x1xf32> to vector<1xf32>
    %19 = vector.shape_cast %18 : vector<1xf32> to vector<1x1xf32>
    %20 = vector.broadcast %19 : vector<1x1xf32> to vector<1x8xf32>
    %21 = arith.subf %0, %20 : vector<1x8xf32>
    %22 = math.exp %21 : vector<1x8xf32>
    %cst_8 = arith.constant dense<0.000000e+00> : vector<1xf32>
    %23 = vector.multi_reduction <add>, %22, %cst_8 [1] : vector<1x8xf32> to vector<1xf32>
    %24 = vector.shape_cast %23 : vector<1xf32> to vector<1x1xf32>
    %cst_9 = arith.constant dense<0.000000e+00> : vector<1xf32>
    %25 = vector.multi_reduction <add>, %24, %cst_9 [0] : vector<1x1xf32> to vector<1xf32>
    %26 = vector.shape_cast %25 : vector<1xf32> to vector<1x1xf32>
    %27 = math.log %26 : vector<1x1xf32>
    %28 = arith.addf %19, %27 : vector<1x1xf32>
    %29 = arith.subf %15, %28 : vector<1x1xf32>
    %c0_10 = arith.constant 0 : index
    %c0_11 = arith.constant 0 : index
    %30 = vector.load %arg2[%c0_10, %c0_11] : memref<1x1xf32, #tpu.memory_space<vmem>>, vector<1x1xf32>
    tpu.vector_store %arg2[%c0_10, %c0_11], %29 {strides = array<i32>} : memref<1x1xf32, #tpu.memory_space<vmem>>, vector<1x1xf32>,
    return
  }
}

</mosaic_0001>

<llo_original>
// kernel: tpu_custom_call.1
$region0: #{tpu_custom_call.1}
  #allocation0 [shape = 'u32[]', space=smem, size = 0x4, offset = 0x4, fixed_abs, tag = 'smem constant byte address 0x4 - core index']
  #allocation1 [shape = 'u32[144,128]{1,0:T(1,128)}', space=vmem, size = 0x12000, scoped, tag = 'internal scratch']
  %s0 = inlined_call_operand.hbm [shape: f32[1,8], index: 0, kind: input, shape index: {}]
  %s1 = inlined_call_operand.vmem [shape: f32[1,8], index: 1, kind: input, shape index: {}]
  %s2 = inlined_call_operand.hbm [shape: f32[1,1], index: 2, kind: output, shape index: {}]
  %s3 = sld [smem:[#allocation0]]
  $region22: #{tpu_custom_call.1} parent=0
    _
  %s5 = ssub.s32 1, %s3
  %s6 = scalar_select 0, %s5, %s3
  $region1: #{tpu_custom_call.1} parent=0
    #allocation2 [shape = 'u8[512]{0}', space=vmem, size = 0x400, scoped, tag = 'input window, operand 0, single buffered']
    #allocation3 [shape = 's32[1]{0}', space=sflag, size = 0x4, scoped, tag = 'scoped memory for tpu_custom_call.1']
    #allocation4 [shape = 's32[1]{0}', space=sflag, size = 0x4, scoped, tag = 'scoped memory for tpu_custom_call.1']
    #allocation5 [shape = 'u8[512]{0}', space=vmem, size = 0x400, scoped, tag = 'output window, operand 0, single buffered']
    %7 = vsyncpa [#allocation3], 0
    %8 = vsyncpa [#allocation4], 0
    // Predicated region
    $region2: #{tpu_custom_call.1} parent=1 // pred_check
      _
    $region3: #{tpu_custom_call.1} parent=1 // pred_check_branch
      %10 = sbr.rel (0) target = $region5
    $region4: #{tpu_custom_call.1} parent=1 // pred_region
      %s12 = ssub.s32 16, 16
      %13 = vsyncadd [#allocation3], %s12
      %s15 = sshll.u32 [#allocation2], 4
      %s16 = int_to_ptr.vmem [resolvable:$true] %s15
      %18 = dma.hbm_to_vmem [thread:$0]  %s0, 16, %s16, [#allocation3]
    $region5: #{tpu_custom_call.1} parent=1 // pred_fallthru
      _
    // Predicated region
    $region6: #{tpu_custom_call.1} parent=1 // pred_check
      _
    $region7: #{tpu_custom_call.1} parent=1 // pred_check_branch
      %20 = sbr.rel (0) target = $region9
    $region8: #{tpu_custom_call.1} parent=1 // pred_region
      _
    $region9: #{tpu_custom_call.1} parent=1 // pred_fallthru
      _
    // Predicated region
    $region10: #{tpu_custom_call.1} parent=1 // pred_check
      _
    $region11: #{tpu_custom_call.1} parent=1 // pred_check_branch
      %22 = sbr.rel (0) target = $region13
    $region12: #{tpu_custom_call.1} parent=1 // pred_region
      %23 = dma.done [#allocation3], 16
    $region13: #{tpu_custom_call.1} parent=1 // pred_fallthru
      _
    %v24 = vld [vmem:[#allocation2] sm:$0x1]
    %v25 = vld [vmem:[%s1] sm:$0x1]
    %v26 = vadd.f32 %v24, %v25
    %vm27 = vcmask 57344
    %v28 = vsel %vm27, %v26, -inf
    %29 = vmax.xlane.f32.xlu0 %v28
    %v30 = vpop.xlane.xlu0 %29
    %v31 = vsub.f32 %v26, %v30
    %v32 = vmul.f32 %v31, 1.442695
    %v33 = vpow.pop %v32
    %v34 = vsel %vm27, %v33, 0.0
    %35 = vadd.xlane.f32.xlu0 %v34
    %v36 = vpop.xlane.xlu0 %35
    %v37 = vadd.f32 %v36, 0.0
    %v38 = vlog2.pop %v37
    %v39 = vmul.f32 %v38, 0.6931472
    %v40 = vadd.f32 %v30, %v39
    %v41 = vsel %vm27, %v24, -inf
    %42 = vmax.xlane.f32.xlu0 %v41
    %v43 = vpop.xlane.xlu0 %42
    %v44 = vsub.f32 %v24, %v43
    %v45 = vmul.f32 %v44, 1.442695
    %v46 = vpow.pop %v45
    %v47 = vsel %vm27, %v46, 0.0
    %48 = vadd.xlane.f32.xlu0 %v47
    %v49 = vpop.xlane.xlu0 %48
    %v50 = vadd.f32 %v49, 0.0
    %v51 = vlog2.pop %v50
    %v52 = vmul.f32 %v51, 0.6931472
    %v53 = vadd.f32 %v43, %v52
    %v54 = vsub.f32 %v40, %v53
    %vm55 = vcmask 0
    %56 = vst.msk [vmem:[#allocation5] sm:$0x1] %vm55, %v54
    // Predicated region
    $region14: #{tpu_custom_call.1} parent=1 // pred_check
      _
    $region15: #{tpu_custom_call.1} parent=1 // pred_check_branch
      %58 = sbr.rel (0) target = $region17
    $region16: #{tpu_custom_call.1} parent=1 // pred_region
      %s60 = ssub.s32 16, 16
      %61 = vsyncadd [#allocation4], %s60
      %s63 = sshll.u32 [#allocation5], 4
      %s64 = int_to_ptr.vmem [resolvable:$true] %s63
      %66 = dma.vmem_to_hbm [thread:$0]  %s64, 16, %s2, [#allocation4]
    $region17: #{tpu_custom_call.1} parent=1 // pred_fallthru
      _
    // Predicated region
    $region18: #{tpu_custom_call.1} parent=1 // pred_check
      _
    $region19: #{tpu_custom_call.1} parent=1 // pred_check_branch
      %68 = sbr.rel (0) target = $region21
    $region20: #{tpu_custom_call.1} parent=1 // pred_region
      %69 = dma.done [#allocation4], 16
    $region21: #{tpu_custom_call.1} parent=1 // pred_fallthru
      _
    %70 = vsyncpa [#allocation3], 1
    %71 = vsyncpa [#allocation4], 1

</llo_original>
